<compile_context>
chip_gen: v7x
topology: tpu7x:2x2x1
jax: 0.10.0
libtpu: 0.0.40
codegen_flags: <defaults>
</compile_context>

<pallas_src>
import numpy as np
import jax
import jax.numpy as jnp
from jax import lax
from jax.experimental import pallas as pl
from jax.experimental.pallas import tpu as pltpu

POOL_SIZES = (1, 2, 4, 8)
SEG_OFFSETS = (0, 1, 5, 21, 85)   # cumulative s*s
OUT_LEN = SEG_OFFSETS[-1]         # 85 useful bins
OUT_PAD = 128                     # lane-dense padded width


def _round_up(v, m):
    return (v + m - 1) // m * m


def _adaptive_pool_matrix(h, w):
    """(H*W, 85) matrix s.t. x_flat @ P == concat of adaptive-avg-pool outputs.

    Uses PyTorch AdaptiveAvgPool2d bin boundaries:
      start = floor(i*H/s), end = ceil((i+1)*H/s).
    """
    cols = []
    for s in POOL_SIZES:
        for i in range(s):
            h0 = (i * h) // s
            h1 = -((-(i + 1) * h) // s)  # ceil
            for j in range(s):
                w0 = (j * w) // s
                w1 = -((-(j + 1) * w) // s)
                col = np.zeros((h, w), dtype=np.float32)
                col[h0:h1, w0:w1] = 1.0 / ((h1 - h0) * (w1 - w0))
                cols.append(col.reshape(-1))
    return np.stack(cols, axis=1)  # (H*W, 85)


def _cpam_enc_kernel(x_ref, p_ref, w_ref, b_ref, o_ref, acc_ref):
    # x_ref : (1, Cp, TK)   bf16   streamed tile of the flattened input
    # p_ref : (TK, 128)     bf16   tile of the pooling matrix
    # w_ref : (4*Cp, Cp)    f32    stacked folded Conv1x1*BN weights (invariant)
    # b_ref : (Cp, 128)     f32    lane-dense bias plane (invariant)
    # o_ref : (1, Cp, 128)  f32
    # acc_ref: (Cp, 128)    f32    pooled-result accumulator (scratch)
    k = pl.program_id(1)

    @pl.when(k == 0)
    def _():
        acc_ref[...] = jnp.zeros_like(acc_ref)

    # All four adaptive average pools for this HW tile in one bf16 MXU matmul,
    # accumulated in f32.
    acc_ref[...] += jnp.dot(x_ref[0], p_ref[...],
                            preferred_element_type=jnp.float32)

    @pl.when(k == pl.num_programs(1) - 1)
    def _():
        pooled = acc_ref[...]                               # (Cp, 128) f32
        cp = pooled.shape[0]
        # One stacked matmul covers all four per-scale 1x1 convs.
        big = jnp.dot(w_ref[...], pooled,
                      preferred_element_type=jnp.float32)   # (4*Cp, 128)
        # Recombine: column segment [lo, hi) belongs to scale s.
        col = lax.broadcasted_iota(jnp.int32, (1, OUT_PAD), 1)
        combined = jnp.zeros_like(pooled)
        for s in range(4):
            lo, hi = SEG_OFFSETS[s], SEG_OFFSETS[s + 1]
            mask = ((col >= lo) & (col < hi)).astype(jnp.float32)
            combined = combined + mask * big[s * cp:(s + 1) * cp, :]
        # Single lane-dense store: bias plane already zero outside [0, 85).
        o_ref[0] = jnp.maximum(combined + b_ref[...], 0.0).astype(o_ref.dtype)


def cpam_enc(x, pool_mat, w_fold, b_fold):
    """x: (B, C, H, W) f32 -> (B, C, 85) f32 (matches torch.cat(feat1..4, 2))."""
    bsz, c, h, w = x.shape
    hw = h * w

    # ---- host-side layout prep -------------------------------------------
    cp = _round_up(c, 8)                       # sublane-aligned channels
    hw128 = _round_up(hw, 128)
    tk = 128 if hw128 <= 512 else 512          # lane tile of the HW axis
    hw_p = _round_up(hw128, tk)
    n_k = hw_p // tk

    # Zero-pad channels and HW; cast the streamed operands to bf16.
    x_flat = x.reshape(bsz, c, hw)
    x_flat = jnp.pad(x_flat, ((0, 0), (0, cp - c), (0, hw_p - hw)))
    x_flat = x_flat.astype(jnp.bfloat16)

    p_pad = jnp.pad(pool_mat, ((0, hw_p - hw), (0, OUT_PAD - OUT_LEN)))
    p_pad = p_pad.astype(jnp.bfloat16)

    # Stack the four folded conv weights into one (4*Cp, Cp) operand and the
    # per-scale biases into one lane-dense (Cp, 128) plane (zero elsewhere).
    w_stack = jnp.zeros((4 * cp, cp), jnp.float32)
    bias_full = jnp.zeros((cp, OUT_PAD), jnp.float32)
    for s in range(4):
        w_stack = w_stack.at[s * cp:s * cp + c, :c].set(w_fold[s])
        lo, hi = SEG_OFFSETS[s], SEG_OFFSETS[s + 1]
        bias_full = bias_full.at[:c, lo:hi].set(
            jnp.broadcast_to(b_fold[s][:, None], (c, hi - lo)))

    # ---- VMEM budget / cost hint ------------------------------------------
    tile_bytes = (2 * cp * tk * 2            # x tile, double-buffered (bf16)
                  + 2 * tk * OUT_PAD * 2     # P tile, double-buffered (bf16)
                  + 2 * 4 * cp * cp * 4      # stacked W (constant index_map)
                  + 2 * cp * OUT_PAD * 4     # bias plane
                  + 2 * cp * OUT_PAD * 4     # output tile
                  + cp * OUT_PAD * 4)        # f32 accumulator scratch
    vmem_limit = int(min(max(2 * tile_bytes, 4 << 20), 48 << 20))

    flops = 2 * bsz * cp * hw_p * OUT_PAD + 2 * bsz * (4 * cp) * cp * OUT_PAD
    bytes_accessed = (bsz * cp * hw_p * 2 + hw_p * OUT_PAD * 2
                      + 4 * cp * cp * 4 + cp * OUT_PAD * 4
                      + bsz * cp * OUT_PAD * 4)

    out_padded = pl.pallas_call(
        _cpam_enc_kernel,
        out_shape=jax.ShapeDtypeStruct((bsz, cp, OUT_PAD), jnp.float32),
        grid_spec=pltpu.PrefetchScalarGridSpec(
            num_scalar_prefetch=0,
            grid=(bsz, n_k),
            in_specs=[
                pl.BlockSpec((1, cp, tk), lambda i, k: (i, 0, k)),
                pl.BlockSpec((tk, OUT_PAD), lambda i, k: (k, 0)),
                pl.BlockSpec((4 * cp, cp), lambda i, k: (0, 0)),
                pl.BlockSpec((cp, OUT_PAD), lambda i, k: (0, 0)),
            ],
            out_specs=pl.BlockSpec((1, cp, OUT_PAD), lambda i, k: (i, 0, 0)),
            scratch_shapes=[pltpu.VMEM((cp, OUT_PAD), jnp.float32)],
        ),
        compiler_params=pltpu.CompilerParams(
            dimension_semantics=("parallel", "arbitrary"),
            vmem_limit_bytes=vmem_limit),
        cost_estimate=pl.CostEstimate(flops=flops, transcendentals=0,
                                      bytes_accessed=bytes_accessed),
    )(x_flat, p_pad, w_stack, bias_full)

    # Drop channel / lane padding.
    return out_padded[:, :c, :OUT_LEN]


def _init_params(key, c):
    """Deterministic Conv1x1(bias=False) + BatchNorm(eval) params, folded.

    Folded:  y = relu(W' @ x + b')  with
      scale = gamma / sqrt(var + eps),  W' = diag(scale) @ W_conv,
      b'    = beta - scale * mean.
    """
    eps = 1e-5
    w_list, b_list = [], []
    for _ in range(4):
        k1, k2, k3, k4, k5, key = jax.random.split(key, 6)
        w_conv = jax.random.normal(k1, (c, c), jnp.float32) * (1.0 / np.sqrt(c))
        gamma = 1.0 + 0.1 * jax.random.normal(k2, (c,), jnp.float32)
        beta = 0.1 * jax.random.normal(k3, (c,), jnp.float32)
        r_mean = 0.1 * jax.random.normal(k4, (c,), jnp.float32)
        r_var = jnp.abs(jax.random.normal(k5, (c,), jnp.float32)) + 0.5
        scale = gamma / jnp.sqrt(r_var + eps)
        w_list.append(scale[:, None] * w_conv)
        b_list.append(beta - scale * r_mean)
    return jnp.stack(w_list, 0), jnp.stack(b_list, 0)   # (4,C,C), (4,C)


def _reference(x, pool_mat, w_fold, b_fold):
    """Pure-JAX f32 reference of the same forward."""
    bsz, c, h, w = x.shape
    x_flat = x.reshape(bsz, c, h * w)
    pooled = jnp.einsum("bcp,pk->bck", x_flat, pool_mat)  # (B, C, 85)
    outs = []
    for s in range(4):
        lo, hi = SEG_OFFSETS[s], SEG_OFFSETS[s + 1]
        seg = pooled[:, :, lo:hi]
        y = jnp.einsum("oc,bck->bok", w_fold[s], seg) + b_fold[s][None, :, None]
        outs.append(jnp.maximum(y, 0.0))
    return jnp.concatenate(outs, axis=2)


if __name__ == "__main__":
    key = jax.random.PRNGKey(0)
    kx, kp = jax.random.split(key)

    B, C, H, W = 2, 4, 16, 16
    x = jax.random.normal(kx, (B, C, H, W), jnp.float32)

    pool_mat = jnp.asarray(_adaptive_pool_matrix(H, W))     # (H*W, 85)
    w_fold, b_fold = _init_params(kp, C)                    # (4,C,C), (4,C)

    out = cpam_enc(x, pool_mat, w_fold, b_fold)
    out = jax.block_until_ready(out)

    ref = _reference(x, pool_mat, w_fold, b_fold)
    assert out.shape == (B, C, OUT_LEN)
    # bf16 input stream (f32 accumulation) -> slightly widened tolerance.
    np.testing.assert_allclose(np.asarray(out), np.asarray(ref),
                               rtol=2e-2, atol=2e-2)
    print("KERNEL_OK")
</pallas_src>

<mosaic_0001>
module attributes {stable_mosaic.version = 11 : i64} {
  func.func @_cpam_enc_kernel(%arg0: i32, %arg1: i32, %arg2: memref<1x8x128xbf16, #tpu.memory_space<vmem>>, %arg3: memref<128x128xbf16, #tpu.memory_space<vmem>>, %arg4: memref<32x8xf32, #tpu.memory_space<vmem>>, %arg5: memref<8x128xf32, #tpu.memory_space<vmem>>, %arg6: memref<1x8x128xf32, #tpu.memory_space<vmem>>, %arg7: memref<8x128xf32, #tpu.memory_space<vmem>>) attributes {dimension_semantics = [#tpu.dimension_semantics<parallel>, #tpu.dimension_semantics<arbitrary>], iteration_bounds = array<i64: 2, 2>, scalar_prefetch = 0 : i64, scratch_operands = 1 : i64, tpu.core_type = #tpu.core_type<tc>, window_params = [{transform_indices = @transform_0, window_bounds = array<i64: 1, 8, 128>}, {transform_indices = @transform_1, window_bounds = array<i64: 128, 128>}, {pipeline_mode = #tpu.pipeline_mode<synchronous>, transform_indices = @transform_2, window_bounds = array<i64: 32, 8>}, {pipeline_mode = #tpu.pipeline_mode<synchronous>, transform_indices = @transform_3, window_bounds = array<i64: 8, 128>}, {transform_indices = @transform_4, window_bounds = array<i64: 1, 8, 128>}]} {
    %c0_i32 = arith.constant 0 : i32
    %0 = arith.cmpi eq, %arg1, %c0_i32 : i32
    %1 = arith.extui %0 : i1 to i32
    %c0_i32_0 = arith.constant 0 : i32
    %2 = arith.cmpi ne, %1, %c0_i32_0 : i32
    scf.if %2 {
      %cst_10 = arith.constant 0.000000e+00 : f32
      %13 = vector.broadcast %cst_10 : f32 to vector<8x128xf32>
      %c0_11 = arith.constant 0 : index
      %c0_12 = arith.constant 0 : index
      %14 = vector.load %arg7[%c0_11, %c0_12] : memref<8x128xf32, #tpu.memory_space<vmem>>, vector<8x128xf32>
      tpu.vector_store %arg7[%c0_11, %c0_12], %13 {strides = array<i32>} : memref<8x128xf32, #tpu.memory_space<vmem>>, vector<8x128xf32>,
    } else {
    }
    %c0 = arith.constant 0 : index
    %c0_1 = arith.constant 0 : index
    %3 = vector.load %arg7[%c0, %c0_1] : memref<8x128xf32, #tpu.memory_space<vmem>>, vector<8x128xf32>
    %c0_2 = arith.constant 0 : index
    %c0_3 = arith.constant 0 : index
    %c0_4 = arith.constant 0 : index
    %4 = vector.load %arg2[%c0_2, %c0_3, %c0_4] : memref<1x8x128xbf16, #tpu.memory_space<vmem>>, vector<1x8x128xbf16>
    %5 = vector.shape_cast %4 : vector<1x8x128xbf16> to vector<8x128xbf16>
    %c0_5 = arith.constant 0 : index
    %c0_6 = arith.constant 0 : index
    %6 = vector.load %arg3[%c0_5, %c0_6] : memref<128x128xbf16, #tpu.memory_space<vmem>>, vector<128x128xbf16>
    %cst = arith.constant dense<0.000000e+00> : vector<8x128xf32>
    %7 = tpu.matmul %5, %6, %cst {dimension_numbers = #tpu.dot_dimension_numbers<[1], [0], [0], [1], [0, 0, 1, 1], [], []>} : vector<8x128xbf16>, vector<128x128xbf16>, vector<8x128xf32> -> vector<8x128xf32>
    %8 = arith.addf %3, %7 : vector<8x128xf32>
    %c0_7 = arith.constant 0 : index
    %c0_8 = arith.constant 0 : index
    %9 = vector.load %arg7[%c0_7, %c0_8] : memref<8x128xf32, #tpu.memory_space<vmem>>, vector<8x128xf32>
    tpu.vector_store %arg7[%c0_7, %c0_8], %8 {strides = array<i32>} : memref<8x128xf32, #tpu.memory_space<vmem>>, vector<8x128xf32>,
    %c1_i32 = arith.constant 1 : i32
    %10 = arith.cmpi eq, %arg1, %c1_i32 : i32
    %11 = arith.extui %10 : i1 to i32
    %c0_i32_9 = arith.constant 0 : i32
    %12 = arith.cmpi ne, %11, %c0_i32_9 : i32
    scf.if %12 {
      %c0_10 = arith.constant 0 : index
      %c0_11 = arith.constant 0 : index
      %13 = vector.load %arg7[%c0_10, %c0_11] : memref<8x128xf32, #tpu.memory_space<vmem>>, vector<8x128xf32>
      %c0_12 = arith.constant 0 : index
      %c0_13 = arith.constant 0 : index
      %14 = vector.load %arg4[%c0_12, %c0_13] : memref<32x8xf32, #tpu.memory_space<vmem>>, vector<32x8xf32>
      %cst_14 = arith.constant dense<0.000000e+00> : vector<32x128xf32>
      %15 = tpu.matmul %14, %13, %cst_14 {dimension_numbers = #tpu.dot_dimension_numbers<[1], [0], [0], [1], [0, 0, 1, 1], [], []>} : vector<32x8xf32>, vector<8x128xf32>, vector<32x128xf32> -> vector<32x128xf32>
      %16 = tpu.iota {dimensions = array<i32: 1>} : vector<1x128xi32>
      %cst_15 = arith.constant 0.000000e+00 : f32
      %17 = vector.broadcast %cst_15 : f32 to vector<8x128xf32>
      %c0_i32_16 = arith.constant 0 : i32
      %18 = vector.broadcast %c0_i32_16 : i32 to vector<1x128xi32>
      %19 = arith.cmpi sge, %16, %18 : vector<1x128xi32>
      %c1_i32_17 = arith.constant 1 : i32
      %20 = vector.broadcast %c1_i32_17 : i32 to vector<1x128xi32>
      %21 = arith.cmpi slt, %16, %20 : vector<1x128xi32>
      %22 = arith.andi %19, %21 : vector<1x128xi1>
      %23 = arith.extui %22 : vector<1x128xi1> to vector<1x128xi32>
      %24 = arith.sitofp %23 : vector<1x128xi32> to vector<1x128xf32>
      %25 = vector.extract_strided_slice %15 {offsets = [0, 0], sizes = [8, 128], strides = [1, 1]} : vector<32x128xf32> to vector<8x128xf32>
      %26 = vector.broadcast %24 : vector<1x128xf32> to vector<8x128xf32>
      %27 = arith.mulf %26, %25 : vector<8x128xf32>
      %28 = arith.addf %17, %27 : vector<8x128xf32>
      %c1_i32_18 = arith.constant 1 : i32
      %29 = vector.broadcast %c1_i32_18 : i32 to vector<1x128xi32>
      %30 = arith.cmpi sge, %16, %29 : vector<1x128xi32>
      %c5_i32 = arith.constant 5 : i32
      %31 = vector.broadcast %c5_i32 : i32 to vector<1x128xi32>
      %32 = arith.cmpi slt, %16, %31 : vector<1x128xi32>
      %33 = arith.andi %30, %32 : vector<1x128xi1>
      %34 = arith.extui %33 : vector<1x128xi1> to vector<1x128xi32>
      %35 = arith.sitofp %34 : vector<1x128xi32> to vector<1x128xf32>
      %36 = vector.extract_strided_slice %15 {offsets = [8, 0], sizes = [8, 128], strides = [1, 1]} : vector<32x128xf32> to vector<8x128xf32>
      %37 = vector.broadcast %35 : vector<1x128xf32> to vector<8x128xf32>
      %38 = arith.mulf %37, %36 : vector<8x128xf32>
      %39 = arith.addf %28, %38 : vector<8x128xf32>
      %c5_i32_19 = arith.constant 5 : i32
      %40 = vector.broadcast %c5_i32_19 : i32 to vector<1x128xi32>
      %41 = arith.cmpi sge, %16, %40 : vector<1x128xi32>
      %c21_i32 = arith.constant 21 : i32
      %42 = vector.broadcast %c21_i32 : i32 to vector<1x128xi32>
      %43 = arith.cmpi slt, %16, %42 : vector<1x128xi32>
      %44 = arith.andi %41, %43 : vector<1x128xi1>
      %45 = arith.extui %44 : vector<1x128xi1> to vector<1x128xi32>
      %46 = arith.sitofp %45 : vector<1x128xi32> to vector<1x128xf32>
      %47 = vector.extract_strided_slice %15 {offsets = [16, 0], sizes = [8, 128], strides = [1, 1]} : vector<32x128xf32> to vector<8x128xf32>
      %48 = vector.broadcast %46 : vector<1x128xf32> to vector<8x128xf32>
      %49 = arith.mulf %48, %47 : vector<8x128xf32>
      %50 = arith.addf %39, %49 : vector<8x128xf32>
      %c21_i32_20 = arith.constant 21 : i32
      %51 = vector.broadcast %c21_i32_20 : i32 to vector<1x128xi32>
      %52 = arith.cmpi sge, %16, %51 : vector<1x128xi32>
      %c85_i32 = arith.constant 85 : i32
      %53 = vector.broadcast %c85_i32 : i32 to vector<1x128xi32>
      %54 = arith.cmpi slt, %16, %53 : vector<1x128xi32>
      %55 = arith.andi %52, %54 : vector<1x128xi1>
      %56 = arith.extui %55 : vector<1x128xi1> to vector<1x128xi32>
      %57 = arith.sitofp %56 : vector<1x128xi32> to vector<1x128xf32>
      %58 = vector.extract_strided_slice %15 {offsets = [24, 0], sizes = [8, 128], strides = [1, 1]} : vector<32x128xf32> to vector<8x128xf32>
      %59 = vector.broadcast %57 : vector<1x128xf32> to vector<8x128xf32>
      %60 = arith.mulf %59, %58 : vector<8x128xf32>
      %61 = arith.addf %50, %60 : vector<8x128xf32>
      %c0_21 = arith.constant 0 : index
      %c0_22 = arith.constant 0 : index
      %62 = vector.load %arg5[%c0_21, %c0_22] : memref<8x128xf32, #tpu.memory_space<vmem>>, vector<8x128xf32>
      %63 = arith.addf %61, %62 : vector<8x128xf32>
      %cst_23 = arith.constant 0.000000e+00 : f32
      %64 = vector.broadcast %cst_23 : f32 to vector<8x128xf32>
      %65 = arith.maximumf %63, %64 : vector<8x128xf32>
      %c0_24 = arith.constant 0 : index
      %c0_25 = arith.constant 0 : index
      %c0_26 = arith.constant 0 : index
      %66 = vector.load %arg6[%c0_24, %c0_25, %c0_26] : memref<1x8x128xf32, #tpu.memory_space<vmem>>, vector<1x8x128xf32>
      %67 = vector.shape_cast %66 : vector<1x8x128xf32> to vector<8x128xf32>
      %68 = vector.shape_cast %65 : vector<8x128xf32> to vector<1x8x128xf32>
      tpu.vector_store %arg6[%c0_24, %c0_25, %c0_26], %68 {strides = array<i32>} : memref<1x8x128xf32, #tpu.memory_space<vmem>>, vector<1x8x128xf32>,
    } else {
    }
    return
  }
  func.func @transform_0(%arg0: i32, %arg1: i32) -> (i32, i32, i32) {
    %c0_i32 = arith.constant 0 : i32
    %c0_i32_0 = arith.constant 0 : i32
    return %arg0, %c0_i32, %arg1 : i32, i32, i32
  }
  func.func @transform_1(%arg0: i32, %arg1: i32) -> (i32, i32) {
    %c0_i32 = arith.constant 0 : i32
    %c0_i32_0 = arith.constant 0 : i32
    return %arg1, %c0_i32 : i32, i32
  }
  func.func @transform_2(%arg0: i32, %arg1: i32) -> (i32, i32) {
    %c0_i32 = arith.constant 0 : i32
    %c0_i32_0 = arith.constant 0 : i32
    %c0_i32_1 = arith.constant 0 : i32
    return %c0_i32, %c0_i32_0 : i32, i32
  }
  func.func @transform_3(%arg0: i32, %arg1: i32) -> (i32, i32) {
    %c0_i32 = arith.constant 0 : i32
    %c0_i32_0 = arith.constant 0 : i32
    %c0_i32_1 = arith.constant 0 : i32
    return %c0_i32, %c0_i32_0 : i32, i32
  }
  func.func @transform_4(%arg0: i32, %arg1: i32) -> (i32, i32, i32) {
    %c0_i32 = arith.constant 0 : i32
    %c0_i32_0 = arith.constant 0 : i32
    %c0_i32_1 = arith.constant 0 : i32
    return %arg0, %c0_i32, %c0_i32_0 : i32, i32, i32
  }
}

</mosaic_0001>

<llo_original>
// kernel: tpu_custom_call.1
$region0: #{tpu_custom_call.1}
  #allocation0 [shape = 'u32[]', space=smem, size = 0x4, offset = 0x4, fixed_abs, tag = 'smem constant byte address 0x4 - core index']
  #allocation1 [shape = 'u32[144,128]{1,0:T(1,128)}', space=vmem, size = 0x12000, scoped, tag = 'internal scratch']
  #allocation2 [shape = 'f32[8,128]{1,0:T(8,128)}', space=vmem, size = 0x1000, scoped, tag = 'scratch operand']
  %s0 = inlined_call_operand.vmem [shape: bf16[2,8,256], index: 0, kind: input, shape index: {}]
  %s1 = inlined_call_operand.hbm [shape: bf16[256,128], index: 1, kind: input, shape index: {}]
  %s2 = inlined_call_operand.vmem [shape: f32[32,8], index: 2, kind: input, shape index: {}]
  %s3 = inlined_call_operand.vmem [shape: f32[8,128], index: 3, kind: input, shape index: {}]
  %s4 = inlined_call_operand.hbm [shape: f32[2,8,128], index: 4, kind: output, shape index: {}]
  %s5 = sld [smem:[#allocation0]]
  $region61: #{tpu_custom_call.1} parent=0
    _
  %s7 = ssub.s32 1, %s5
  %s8 = scalar_select 0, %s7, %s5
  $region1: #{tpu_custom_call.1} parent=0
    #allocation3 [shape = 'u8[65536]{0}', space=vmem, size = 0x10000, scoped, tag = 'input window, operand 1']
    #allocation4 [shape = 's32[2]{0}', space=sflag, size = 0x8, scoped, tag = 'scoped memory for tpu_custom_call.1']
    #allocation5 [shape = 's32[2]{0}', space=sflag, size = 0x8, scoped, tag = 'scoped memory for tpu_custom_call.1']
    #allocation6 [shape = 'u8[8192]{0}', space=vmem, size = 0x2000, scoped, tag = 'output window, operand 0']
    %9 = vsyncpa [#allocation4], 0
    %s10 = scalar_lea.sflag [#allocation4], 1
    %11 = vsyncpa %s10, 0
    %12 = vsyncpa [#allocation5], 0
    %s13 = scalar_lea.sflag [#allocation5], 1
    %14 = vsyncpa %s13, 0
    loop: start=0, step=1, limit=6
    $region2: #{tpu_custom_call.1} parent=1 // loop_pre_header
      _
    $region3: #{tpu_custom_call.1} parent=1 // loop_header
      %s16 = sphi 0, %s20
      %p17 = scmp.ge.s32.totalorder %s16, 6
      %s23 = sphi 0, %s35
      %s24 = sphi 0, %s31
      %s25 = sphi 0, %s23
      %s26 = sphi 0, %s24
      %s27 = sphi 0, %s25
      %s28 = sphi 0, %s26
      %s40 = sphi 0, %s42
      %s43 = sphi 0, %s40
      %s44 = sphi 0, %s43
      %s60 = sphi 0, %s44
      %s66 = sphi 0, %s68
      %s69 = sphi 0, %s66
      %s70 = sphi 0, %s69
      %s86 = sphi 0, %s70
      %s90 = sphi 0, %s90
      %s92 = sphi 0, %s90
      %s93 = sphi 0, %s92
      %s107 = sphi 0, %s93
      %s111 = sphi 0, %s111
      %s113 = sphi 0, %s111
      %s114 = sphi 0, %s113
      %s128 = sphi 0, %s114
      %s134 = sphi 0, %s136
      %s137 = sphi 0, %s134
      %s138 = sphi 0, %s137
      %s154 = sphi 0, %s138
    $region4: #{tpu_custom_call.1} parent=1 // loop_header_branch
      %19 = sbr.rel (%p17) target = $region8
    $region5: #{tpu_custom_call.1} parent=1 // loop_body
      %s21 = ssub.s32 %s16, 1
      %s22 = ssub.s32 %s16, 2
      %s29 = sadd.s32 1, %s24
      %p30 = scmp.ge.s32.totalorder %s29, 2
      %s31 = scalar_select %p30, 0, %s29
      %s32 = sadd.s32 1, %s23
      %s33 = scalar_select %p30, %s32, %s23
      %p34 = scmp.ge.s32.totalorder %s33, 2
      %s35 = scalar_select %p34, 0, %s33
      %s36 = ssub.s32 %s23, %s35
      %s37 = ssub.s32 %s24, %s31
      %s38 = sor.u32 %s36, %s37
      %p39 = scmp.eq.s32.totalorder %s38, 0
      %s41 = sadd.s32 %s40, 1
      %s42 = scalar_select %p39, %s40, %s41
      %p45 = pneg %p39
      %p46 = scmp.eq.s32.totalorder %s16, 3
      %p47 = por %p45, %p46
      %p48 = scmp.ne.s32.totalorder %s40, %s43
      %p49 = scmp.eq.s32.totalorder %s16, 0
      %p50 = por %p48, %p49
      %p51 = scmp.ne.s32.totalorder %s40, %s43
      %p52 = scmp.eq.s32.totalorder %s21, 3
      %p53 = por %p51, %p52
      %p54 = scmp.ne.s32.totalorder %s43, %s44
      %p55 = scmp.eq.s32.totalorder %s21, 0
      %p56 = por %p54, %p55
      %p57 = scmp.ne.s32.totalorder %s43, %s44
      %p58 = scmp.eq.s32.totalorder %s22, 3
      %p59 = por %p57, %p58
      %p61 = scmp.ne.s32.totalorder %s44, %s60
      %p62 = scmp.eq.s32.totalorder %s22, 0
      %p63 = por %p61, %p62
      %s64 = ssub.s32 %s24, %s31
      %p65 = scmp.eq.s32.totalorder %s64, 0
      %s67 = sadd.s32 %s66, 1
      %s68 = scalar_select %p65, %s66, %s67
      %p71 = pneg %p65
      %p72 = scmp.eq.s32.totalorder %s16, 3
      %p73 = por %p71, %p72
      %p74 = scmp.ne.s32.totalorder %s66, %s69
      %p75 = scmp.eq.s32.totalorder %s16, 0
      %p76 = por %p74, %p75
      %p77 = scmp.ne.s32.totalorder %s66, %s69
      %p78 = scmp.eq.s32.totalorder %s21, 3
      %p79 = por %p77, %p78
      %p80 = scmp.ne.s32.totalorder %s69, %s70
      %p81 = scmp.eq.s32.totalorder %s21, 0
      %p82 = por %p80, %p81
      %p83 = scmp.ne.s32.totalorder %s69, %s70
      %p84 = scmp.eq.s32.totalorder %s22, 3
      %p85 = por %p83, %p84
      %p87 = scmp.ne.s32.totalorder %s70, %s86
      %p88 = scmp.eq.s32.totalorder %s22, 0
      %p89 = por %p87, %p88
      %s91 = sadd.s32 %s90, 1
      %p94 = scmp.eq.s32.totalorder %s16, 3
      %p95 = scmp.ne.s32.totalorder %s90, %s92
      %p96 = scmp.eq.s32.totalorder %s16, 0
      %p97 = por %p95, %p96
      %p98 = scmp.ne.s32.totalorder %s90, %s92
      %p99 = scmp.eq.s32.totalorder %s21, 3
      %p100 = por %p98, %p99
      %p101 = scmp.ne.s32.totalorder %s92, %s93
      %p102 = scmp.eq.s32.totalorder %s21, 0
      %p103 = por %p101, %p102
      %p104 = scmp.ne.s32.totalorder %s92, %s93
      %p105 = scmp.eq.s32.totalorder %s22, 3
      %p106 = por %p104, %p105
      %p108 = scmp.ne.s32.totalorder %s93, %s107
      %p109 = scmp.eq.s32.totalorder %s22, 0
      %p110 = por %p108, %p109
      %s112 = sadd.s32 %s111, 1
      %p115 = scmp.eq.s32.totalorder %s16, 3
      %p116 = scmp.ne.s32.totalorder %s111, %s113
      %p117 = scmp.eq.s32.totalorder %s16, 0
      %p118 = por %p116, %p117
      %p119 = scmp.ne.s32.totalorder %s111, %s113
      %p120 = scmp.eq.s32.totalorder %s21, 3
      %p121 = por %p119, %p120
      %p122 = scmp.ne.s32.totalorder %s113, %s114
      %p123 = scmp.eq.s32.totalorder %s21, 0
      %p124 = por %p122, %p123
      %p125 = scmp.ne.s32.totalorder %s113, %s114
      %p126 = scmp.eq.s32.totalorder %s22, 3
      %p127 = por %p125, %p126
      %p129 = scmp.ne.s32.totalorder %s114, %s128
      %p130 = scmp.eq.s32.totalorder %s22, 0
      %p131 = por %p129, %p130
      %s132 = ssub.s32 %s23, %s35
      %p133 = scmp.eq.s32.totalorder %s132, 0
      %s135 = sadd.s32 %s134, 1
      %s136 = scalar_select %p133, %s134, %s135
      %p139 = pneg %p133
      %p140 = scmp.eq.s32.totalorder %s16, 3
      %p141 = por %p139, %p140
      %p142 = scmp.ne.s32.totalorder %s134, %s137
      %p143 = scmp.eq.s32.totalorder %s16, 0
      %p144 = por %p142, %p143
      %p145 = scmp.ne.s32.totalorder %s134, %s137
      %p146 = scmp.eq.s32.totalorder %s21, 3
      %p147 = por %p145, %p146
      %p148 = scmp.ne.s32.totalorder %s137, %s138
      %p149 = scmp.eq.s32.totalorder %s21, 0
      %p150 = por %p148, %p149
      %p151 = scmp.ne.s32.totalorder %s137, %s138
      %p152 = scmp.eq.s32.totalorder %s22, 3
      %p153 = por %p151, %p152
      %p155 = scmp.ne.s32.totalorder %s138, %s154
      %p156 = scmp.eq.s32.totalorder %s22, 0
      %p157 = por %p155, %p156
      %p158 = scmp.le.s32.totalorder 1, %s16
      %p159 = scmp.lt.s32.totalorder %s16, 5
      %p160 = pnand %p158, %p159
      %p161 = pneg %p160
      // Predicated region
      $region9: #{tpu_custom_call.1} parent=5 // pred_check
        _
      $region10: #{tpu_custom_call.1} parent=5 // pred_check_branch
        %163 = sbr.rel (%p160) target = $region12
      $region11: #{tpu_custom_call.1} parent=5 // pred_region
        %s164 = ssub.s32 %s16, 1
        // Predicated region
        $region13: #{tpu_custom_call.1} parent=11 // pred_check
          %p165 = pneg %p103
        $region14: #{tpu_custom_call.1} parent=11 // pred_check_branch
          %167 = sbr.rel (%p165) target = $region16
        $region15: #{tpu_custom_call.1} parent=11 // pred_region
          _
        $region16: #{tpu_custom_call.1} parent=11 // pred_fallthru
          _
        // Predicated region
        $region17: #{tpu_custom_call.1} parent=11 // pred_check
          %p168 = pneg %p124
        $region18: #{tpu_custom_call.1} parent=11 // pred_check_branch
          %170 = sbr.rel (%p168) target = $region20
        $region19: #{tpu_custom_call.1} parent=11 // pred_region
          _
        $region20: #{tpu_custom_call.1} parent=11 // pred_fallthru
          _
      $region12: #{tpu_custom_call.1} parent=5 // pred_fallthru
        _
      %p171 = scmp.lt.s32.totalorder %s16, 4
      // Predicated region
      $region21: #{tpu_custom_call.1} parent=5 // pred_check
        %p172 = pneg %p171
      $region22: #{tpu_custom_call.1} parent=5 // pred_check_branch
        %174 = sbr.rel (%p172) target = $region24
      $region23: #{tpu_custom_call.1} parent=5 // pred_region
        // Predicated region
        $region25: #{tpu_custom_call.1} parent=23 // pred_check
          %p175 = pneg %p50
        $region26: #{tpu_custom_call.1} parent=23 // pred_check_branch
          %177 = sbr.rel (%p175) target = $region28
        $region27: #{tpu_custom_call.1} parent=23 // pred_region
          %p178 = scmp.lt.s32.totalorder %s23, 1
          %s179 = scalar_select %p178, %s23, 1
          %p180 = scmp.lt.s32.totalorder %s24, 1
          %s181 = scalar_select %p180, %s24, 1
          %s182 = smul.addr %s179, 2
          %s183 = sadd.s32 %s181, %s182
          %s184 = smul.addr %s183, 4
          %s185 = scalar_lea.vmem %s0, %s184
        $region28: #{tpu_custom_call.1} parent=23 // pred_fallthru
          _
        // Predicated region
        $region29: #{tpu_custom_call.1} parent=23 // pred_check
          %p186 = pneg %p76
        $region30: #{tpu_custom_call.1} parent=23 // pred_check_branch
          %188 = sbr.rel (%p186) target = $region32
        $region31: #{tpu_custom_call.1} parent=23 // pred_region
          %s189 = sand.u32 %s66, 1
          %s190 = scalar_lea.sflag [#allocation4], %s189
          %s191 = sand.u32 %s66, 1
          %s192 = smul.addr %s191, 64
          %s193 = scalar_lea.vmem [#allocation3], %s192
          %s194 = smul.u32 16, %s24
          %s196 = ssub.s32 1024, 1024
          %197 = vsyncadd %s190, %s196
          %s198 = smul.addr %s194, 64
          %s199 = scalar_lea.hbm %s1, %s198
          %s200 = sshll.u32 %s193, 4
          %s201 = int_to_ptr.vmem [resolvable:$true] %s200
          %206 = dma.hbm_to_vmem [thread:$0]  %s199, 1024, %s201, %s190, 64, 64, 4
        $region32: #{tpu_custom_call.1} parent=23 // pred_fallthru
          _
      $region24: #{tpu_custom_call.1} parent=5 // pred_fallthru
        _
      %p207 = scmp.le.s32.totalorder 1, %s16
      %p208 = scmp.lt.s32.totalorder %s16, 5
      %p209 = pnand %p207, %p208
      %p210 = pneg %p209
      // Predicated region
      $region33: #{tpu_custom_call.1} parent=5 // pred_check
        _
      $region34: #{tpu_custom_call.1} parent=5 // pred_check_branch
        %212 = sbr.rel (%p209) target = $region36
      $region35: #{tpu_custom_call.1} parent=5 // pred_region
        %s213 = ssub.s32 %s16, 1
        %s214 = sand.u32 %s69, 1
        %s215 = scalar_lea.sflag [#allocation4], %s214
        %s216 = sand.u32 %s69, 1
        %s217 = smul.addr %s216, 64
        %s218 = scalar_lea.vmem [#allocation3], %s217
        // Predicated region
        $region37: #{tpu_custom_call.1} parent=35 // pred_check
          %p219 = pneg %p82
        $region38: #{tpu_custom_call.1} parent=35 // pred_check_branch
          %221 = sbr.rel (%p219) target = $region40
        $region39: #{tpu_custom_call.1} parent=35 // pred_region
          %222 = dma.done %s215, 1024
        $region40: #{tpu_custom_call.1} parent=35 // pred_fallthru
          _
        %p223 = scmp.lt.s32.totalorder %s25, 1
        %s224 = scalar_select %p223, %s25, 1
        %p225 = scmp.lt.s32.totalorder %s26, 1
        %s226 = scalar_select %p225, %s26, 1
        %s227 = smul.addr %s224, 2
        %s228 = sadd.s32 %s226, %s227
        %s229 = smul.addr %s228, 4
        %s230 = scalar_lea.vmem %s0, %s229
        %p231 = pneg %p56
        %p232 = pneg %p53
        %s233 = sand.u32 %s69, 1
        %s234 = scalar_lea.sflag [#allocation4], %s233
        %s235 = sand.u32 %s69, 1
        %s236 = smul.addr %s235, 64
        %s237 = scalar_lea.vmem [#allocation3], %s236
        %p238 = pneg %p82
        %p239 = pneg %p79
        %p240 = pneg %p103
        %p241 = pneg %p100
        %p242 = pneg %p124
        %p243 = pneg %p121
        %p244 = pneg %p150
        %p245 = pneg %p147
        %s246 = sand.u32 %s137, 1
        %s247 = scalar_lea.sflag [#allocation5], %s246
        %s248 = sand.u32 %s137, 1
        %s249 = smul.addr %s248, 8
        %s250 = scalar_lea.vmem [#allocation6], %s249
        %p251 = scmp.lt.s32.totalorder %s25, 1
        %s252 = scalar_select %p251, %s25, 1
        %p253 = scmp.lt.s32.totalorder %s26, 1
        %s254 = scalar_select %p253, %s26, 1
        %s255 = smul.addr %s252, 2
        %s256 = sadd.s32 %s254, %s255
        %s257 = smul.addr %s256, 4
        %s258 = scalar_lea.vmem %s0, %s257
        %s259 = smul.u32 16, %s26
        %p261 = scmp.eq.s32.totalorder %s26, 0
        // Predicated region
        $region41: #{tpu_custom_call.1} parent=35 // pred_check
          %p262 = pneg %p261
        $region42: #{tpu_custom_call.1} parent=35 // pred_check_branch
          %264 = sbr.rel (%p262) target = $region44
        $region43: #{tpu_custom_call.1} parent=35 // pred_region
          %265 = vst [vmem:[#allocation2] sm:$0xff] 0.0
        $region44: #{tpu_custom_call.1} parent=35 // pred_fallthru
          _
        %v266 = vld [vmem:[#allocation2] sm:$0xff]
        %v267 = vld [vmem:[%s258] sm:$0xf]
        %v268 = vld [vmem:[%s218] sm:$0xf]
        %v269 = vld [vmem:[%s218 + $0x4] sm:$0xf]
        %v270 = vld [vmem:[%s218 + $0x8] sm:$0xf]
        %v271 = vld [vmem:[%s218 + $0xc] sm:$0xf]
        %v272 = vld [vmem:[%s218 + $0x10] sm:$0xf]
        %v273 = vld [vmem:[%s218 + $0x14] sm:$0xf]
        %v274 = vld [vmem:[%s218 + $0x18] sm:$0xf]
        %v275 = vld [vmem:[%s218 + $0x1c] sm:$0xf]
        %v276 = vld [vmem:[%s218 + $0x20] sm:$0xf]
        %v277 = vld [vmem:[%s218 + $0x24] sm:$0xf]
        %v278 = vld [vmem:[%s218 + $0x28] sm:$0xf]
        %v279 = vld [vmem:[%s218 + $0x2c] sm:$0xf]
        %v280 = vld [vmem:[%s218 + $0x30] sm:$0xf]
        %v281 = vld [vmem:[%s218 + $0x34] sm:$0xf]
        %v282 = vld [vmem:[%s218 + $0x38] sm:$0xf]
        %v283 = vld [vmem:[%s218 + $0x3c] sm:$0xf]
        %v300 = vunpack.c.l.b16 %v268
        %v301 = vunpack.c.l.b16 %v269
        %v302 = vunpack.c.l.b16 %v270
        %v303 = vunpack.c.l.b16 %v271
        %v304 = vunpack.c.l.b16 %v272
        %v305 = vunpack.c.l.b16 %v273
        %v306 = vunpack.c.l.b16 %v274
        %v307 = vunpack.c.l.b16 %v275
        %v308 = vunpack.c.l.b16 %v276
        %v309 = vunpack.c.l.b16 %v277
        %v310 = vunpack.c.l.b16 %v278
        %v311 = vunpack.c.l.b16 %v279
        %v312 = vunpack.c.l.b16 %v280
        %v313 = vunpack.c.l.b16 %v281
        %v314 = vunpack.c.l.b16 %v282
        %v315 = vunpack.c.l.b16 %v283
        %v316 = vpack.c.b16 %v301, %v300
        %v317 = vpack.c.b16 %v303, %v302
        %v318 = vpack.c.b16 %v305, %v304
        %v319 = vpack.c.b16 %v307, %v306
        %v320 = vpack.c.b16 %v309, %v308
        %v321 = vpack.c.b16 %v311, %v310
        %v322 = vpack.c.b16 %v313, %v312
        %v323 = vpack.c.b16 %v315, %v314
        %332 = vmatprep.subr.bf16.mxu0 0
        %333 = vmatpush1.bf16.msra.mxu0 %v316
        %334 = vmatprep.subr.bf16.mxu0 0
        %335 = vmatpush1.bf16.msra.mxu0 %v317
        %336 = vmatprep.subr.bf16.mxu0 0
        %337 = vmatpush1.bf16.msra.mxu0 %v318
        %338 = vmatprep.subr.bf16.mxu0 0
        %339 = vmatpush1.bf16.msra.mxu0 %v319
        %340 = vmatprep.subr.bf16.mxu0 0
        %341 = vmatpush1.bf16.msra.mxu0 %v320
        %342 = vmatprep.subr.bf16.mxu0 0
        %343 = vmatpush1.bf16.msra.mxu0 %v321
        %344 = vmatprep.subr.bf16.mxu0 0
        %345 = vmatpush1.bf16.msra.mxu0 %v322
        %346 = vmatprep.subr.bf16.mxu0 0
        %347 = vmatpush1.bf16.msra.mxu0 %v323
        %348 = vmatprep.subr.bf16.mxu0 0
        %349 = vmatpush1.bf16.msra.mxu0 0
        %350 = vmatprep.subr.bf16.mxu0 0
        %351 = vmatpush1.bf16.msra.mxu0 0
        %352 = vmatprep.subr.bf16.mxu0 0
        %353 = vmatpush1.bf16.msra.mxu0 0
        %354 = vmatprep.subr.bf16.mxu0 0
        %355 = vmatpush1.bf16.msra.mxu0 0
        %356 = vmatprep.subr.bf16.mxu0 0
        %357 = vmatpush1.bf16.msra.mxu0 0
        %358 = vmatprep.subr.bf16.mxu0 0
        %359 = vmatpush1.bf16.msra.mxu0 0
        %360 = vmatprep.subr.bf16.mxu0 0
        %361 = vmatpush1.bf16.msra.mxu0 0
        %362 = vmatprep.subr.bf16.mxu0 0
        %363 = vmatpush1.bf16.msra.mxu0 0
        %364 = vmatprep.mubr.bf16.mxu0 0
        %365 = vmatmul.mubr.bf16.gmra.mrb[0].mxu0 %v267
        %v366 = vpop.f32.mrb[0].mxu0
        %v367 = vadd.f32 0.0, %v366
        %v368 = vpop.f32.mrb[0].mxu0
        %v369 = vpop.f32.mrb[0].mxu0
        %v370 = vpop.f32.mrb[0].mxu0
        %371 = vdwg.mxu0
        %v372 = vadd.f32 %v266, %v367
        %373 = vst [vmem:[#allocation2] sm:$0xff] %v372
        %p374 = scmp.eq.s32.totalorder %s26, 1
        // Predicated region
        $region45: #{tpu_custom_call.1} parent=35 // pred_check
          %p375 = pneg %p374
        $region46: #{tpu_custom_call.1} parent=35 // pred_check_branch
          %377 = sbr.rel (%p375) target = $region48
        $region47: #{tpu_custom_call.1} parent=35 // pred_region
          %v378 = vld [vmem:[#allocation2] sm:$0xff]
          %v379 = vld [vmem:[%s2] sm:$0xff]
          %v380 = vld [vmem:[%s2 + $0x8] sm:$0xff]
          %v381 = vld [vmem:[%s2 + $0x10] sm:$0xff]
          %v382 = vld [vmem:[%s2 + $0x18] sm:$0xff]
          %vm383 = vcmask 64512
          %v385 = vsel %vm383, %v379, 0
          %v388 = vsel %vm383, %v380, 0
          %v391 = vsel %vm383, %v381, 0
          %v394 = vsel %vm383, %v382, 0
          %396 = vmatprep.subr.mxu0 0.0
          %397 = vmatpush1.msra.mxu0 %v378
          %398 = vmatprep.subr.mxu0 0.0
          %399 = vmatpush1.msra.mxu0 0.0
          %400 = vmatprep.subr.mxu0 0.0
          %401 = vmatpush1.msra.mxu0 0.0
          %402 = vmatprep.subr.mxu0 0.0
          %403 = vmatpush1.msra.mxu0 0.0
          %404 = vmatprep.subr.mxu0 0.0
          %405 = vmatpush1.msra.mxu0 0.0
          %406 = vmatprep.subr.mxu0 0.0
          %407 = vmatpush1.msra.mxu0 0.0
          %408 = vmatprep.subr.mxu0 0.0
          %409 = vmatpush1.msra.mxu0 0.0
          %410 = vmatprep.subr.mxu0 0.0
          %411 = vmatpush1.msra.mxu0 0.0
          %412 = vmatprep.subr.mxu0 0.0
          %413 = vmatpush1.msra.mxu0 0.0
          %414 = vmatprep.subr.mxu0 0.0
          %415 = vmatpush1.msra.mxu0 0.0
          %416 = vmatprep.subr.mxu0 0.0
          %417 = vmatpush1.msra.mxu0 0.0
          %418 = vmatprep.subr.mxu0 0.0
          %419 = vmatpush1.msra.mxu0 0.0
          %420 = vmatprep.subr.mxu0 0.0
          %421 = vmatpush1.msra.mxu0 0.0
          %422 = vmatprep.subr.mxu0 0.0
          %423 = vmatpush1.msra.mxu0 0.0
          %424 = vmatprep.subr.mxu0 0.0
          %425 = vmatpush1.msra.mxu0 0.0
          %426 = vmatprep.subr.mxu0 0.0
          %427 = vmatpush1.msra.mxu0 0.0
          %428 = vmatprep.subr.mxu0 0.0
          %429 = vmatpush1.msra.mxu0 0.0
          %430 = vmatprep.subr.mxu0 0.0
          %431 = vmatpush1.msra.mxu0 0.0
          %432 = vmatprep.subr.mxu0 0.0
          %433 = vmatpush1.msra.mxu0 0.0
          %434 = vmatprep.subr.mxu0 0.0
          %435 = vmatpush1.msra.mxu0 0.0
          %436 = vmatprep.subr.mxu0 0.0
          %437 = vmatpush1.msra.mxu0 0.0
          %438 = vmatprep.subr.mxu0 0.0
          %439 = vmatpush1.msra.mxu0 0.0
          %440 = vmatprep.subr.mxu0 0.0
          %441 = vmatpush1.msra.mxu0 0.0
          %442 = vmatprep.subr.mxu0 0.0
          %443 = vmatpush1.msra.mxu0 0.0
          %444 = vmatprep.subr.mxu0 0.0
          %445 = vmatpush1.msra.mxu0 0.0
          %446 = vmatprep.subr.mxu0 0.0
          %447 = vmatpush1.msra.mxu0 0.0
          %448 = vmatprep.subr.mxu0 0.0
          %449 = vmatpush1.msra.mxu0 0.0
          %450 = vmatprep.subr.mxu0 0.0
          %451 = vmatpush1.msra.mxu0 0.0
          %452 = vmatprep.subr.mxu0 0.0
          %453 = vmatpush1.msra.mxu0 0.0
          %454 = vmatprep.subr.mxu0 0.0
          %455 = vmatpush1.msra.mxu0 0.0
          %456 = vmatprep.subr.mxu0 0.0
          %457 = vmatpush1.msra.mxu0 0.0
          %458 = vmatprep.subr.mxu0 0.0
          %459 = vmatpush1.msra.mxu0 0.0
          %460 = vmatprep.mubr.f32.mxu0 0.0
          %461 = vmatmul.mubr.f32.gmra.mrb[0].mxu0 %v385
          %v462 = vpop.f32.mrb[0].mxu0
          %v463 = vadd.f32 0.0, %v462
          %v464 = vpop.f32.mrb[0].mxu0
          %465 = vmatprep.mubr.f32.mxu0 0.0
          %466 = vmatmul.mubr.f32.gmra.mrb[0].mxu0 %v388
          %v467 = vpop.f32.mrb[0].mxu0
          %v468 = vadd.f32 0.0, %v467
          %v469 = vpop.f32.mrb[0].mxu0
          %470 = vmatprep.mubr.f32.mxu0 0.0
          %471 = vmatmul.mubr.f32.gmra.mrb[0].mxu0 %v391
          %v472 = vpop.f32.mrb[0].mxu0
          %v473 = vadd.f32 0.0, %v472
          %v474 = vpop.f32.mrb[0].mxu0
          %475 = vmatprep.mubr.f32.mxu0 0.0
          %476 = vmatmul.mubr.f32.gmra.mrb[0].mxu0 %v394
          %v477 = vpop.f32.mrb[0].mxu0
          %v478 = vadd.f32 0.0, %v477
          %v479 = vpop.f32.mrb[0].mxu0
          %480 = vdwg.mxu0
          %v481 = vlaneseq
          %v482 = vand.u32 %v481, 127
          %vm483 = vcmp.ge.s32.totalorder %v482, 0
          %vm484 = vcmp.lt.s32.totalorder %v482, 1
          %vm485 = vmand %vm483, %vm484
          %v486 = vsel %vm485, 1, 0
          %v487 = vcvt.s32.f32 %v486
          %v488 = vmul.f32 %v487, %v463
          %v489 = vadd.f32 %v488, 0.0
          %vm490 = vcmp.ge.s32.totalorder %v482, 1
          %vm491 = vcmp.lt.s32.totalorder %v482, 5
          %vm492 = vmand %vm490, %vm491
          %v493 = vsel %vm492, 1, 0
          %v494 = vcvt.s32.f32 %v493
          %v495 = vmul.f32 %v494, %v468
          %v496 = vadd.f32 %v489, %v495
          %vm497 = vcmp.ge.s32.totalorder %v482, 5
          %vm498 = vcmp.lt.s32.totalorder %v482, 21
          %vm499 = vmand %vm497, %vm498
          %v500 = vsel %vm499, 1, 0
          %v501 = vcvt.s32.f32 %v500
          %v502 = vmul.f32 %v501, %v473
          %v503 = vadd.f32 %v496, %v502
          %vm504 = vcmp.ge.s32.totalorder %v482, 21
          %vm505 = vcmp.lt.s32.totalorder %v482, 85
          %vm506 = vmand %vm504, %vm505
          %v507 = vsel %vm506, 1, 0
          %v508 = vcvt.s32.f32 %v507
          %v509 = vmul.f32 %v508, %v478
          %v510 = vadd.f32 %v503, %v509
          %v511 = vld [vmem:[%s3] sm:$0xff]
          %v512 = vadd.f32 %v510, %v511
          %v513 = vmax.f32 %v512, 0.0
          %514 = vst [vmem:[%s250] sm:$0xff] %v513
        $region48: #{tpu_custom_call.1} parent=35 // pred_fallthru
          _
        %s515 = sand.u32 %s137, 1
        %s516 = scalar_lea.sflag [#allocation5], %s515
        %s517 = sand.u32 %s137, 1
        %s518 = smul.addr %s517, 8
        %s519 = scalar_lea.vmem [#allocation6], %s518
        // Predicated region
        $region49: #{tpu_custom_call.1} parent=35 // pred_check
          %p520 = pneg %p147
        $region50: #{tpu_custom_call.1} parent=35 // pred_check_branch
          %522 = sbr.rel (%p520) target = $region52
        $region51: #{tpu_custom_call.1} parent=35 // pred_region
          %s524 = ssub.s32 128, 128
          %525 = vsyncadd %s516, %s524
          %s526 = smul.addr %s25, 128
          %s527 = scalar_lea.hbm %s4, %s526
          %s529 = sshll.u32 %s519, 4
          %s530 = int_to_ptr.vmem [resolvable:$true] %s529
          %532 = dma.vmem_to_hbm [thread:$0]  %s530, 128, %s527, %s516
        $region52: #{tpu_custom_call.1} parent=35 // pred_fallthru
          _
      $region36: #{tpu_custom_call.1} parent=5 // pred_fallthru
        _
      %p533 = scmp.le.s32.totalorder 2, %s16
      // Predicated region
      $region53: #{tpu_custom_call.1} parent=5 // pred_check
        %p534 = pneg %p533
      $region54: #{tpu_custom_call.1} parent=5 // pred_check_branch
        %536 = sbr.rel (%p534) target = $region56
      $region55: #{tpu_custom_call.1} parent=5 // pred_region
        %s537 = ssub.s32 %s16, 2
        // Predicated region
        $region57: #{tpu_custom_call.1} parent=55 // pred_check
          %p538 = pneg %p153
        $region58: #{tpu_custom_call.1} parent=55 // pred_check_branch
          %540 = sbr.rel (%p538) target = $region60
        $region59: #{tpu_custom_call.1} parent=55 // pred_region
          %s541 = sand.u32 %s138, 1
          %s542 = scalar_lea.sflag [#allocation5], %s541
          %s543 = sand.u32 %s138, 1
          %s544 = smul.addr %s543, 8
          %s545 = scalar_lea.vmem [#allocation6], %s544
          %546 = dma.done %s542, 128
        $region60: #{tpu_custom_call.1} parent=55 // pred_fallthru
          _
      $region56: #{tpu_custom_call.1} parent=5 // pred_fallthru
        _
    $region6: #{tpu_custom_call.1} parent=1 // loop_footer
      %s20 = sadd.s32 1, %s16
    $region7: #{tpu_custom_call.1} parent=1 // loop_footer_branch
      %15 = sbr.rel target = $region3
    $region8: #{tpu_custom_call.1} parent=1 // loop_exit
      _
    %547 = vsyncpa [#allocation4], 1
    %s548 = scalar_lea.sflag [#allocation4], 1
    %549 = vsyncpa %s548, 1
    %550 = vsyncpa [#allocation5], 1
    %s551 = scalar_lea.sflag [#allocation5], 1
    %552 = vsyncpa %s551, 1

</llo_original>
